<compile_context>
chip_gen: v6e
topology: v6e:2x2x1
jax: 0.10.0
libtpu: 0.0.40
codegen_flags: <defaults>
</compile_context>

<pallas_src>
import functools
import math

import jax
import jax.numpy as jnp
from jax import lax
from jax.experimental import pallas as pl
from jax.experimental.pallas import tpu as pltpu

_LANES = 128
_C_CANDIDATES = (2048, 1024, 512, 256, 128)


def _cdiv(a, b):
    return -(-a // b)


def _round_up(a, b):
    return _cdiv(a, b) * b


@functools.lru_cache(maxsize=1)
def _chip_config():
    """(num_core_splits, vmem_limit_bytes, per_input_tile_bytes) per chip gen."""
    kind = ""
    try:
        kind = jax.devices()[0].device_kind.lower()
    except Exception:  # defensive: never fail config lookup
        pass
    is_v7 = ("v7" in kind) or ("7x" in kind) or ("tpu7" in kind)
    if is_v7:   # 2 TensorCores, 64 MiB VMEM per core
        return 2, 48 * 1024 * 1024, 6 * 1024 * 1024
    # v5e / v6e: 1 TensorCore, 128 MiB VMEM
    return 1, 64 * 1024 * 1024, 8 * 1024 * 1024


def _sublane_multiple(*dtypes):
    m = 8
    for dt in dtypes:
        isz = jnp.dtype(dt).itemsize
        m = max(m, {4: 8, 2: 16, 1: 32}.get(isz, 8))
    return m


def _choose_layout(n_elems, leading):
    """Lane-dense (rows, cols) view of the flattened input (cols a multiple of
    128) when an exact divisor exists; otherwise keep the (leading, features)
    view (a full-width last dim is still a legal block shape)."""
    for c in _C_CANDIDATES:                       # prefer >= 8 rows
        if n_elems % c == 0 and n_elems // c >= 8:
            return n_elems // c, c
    for c in _C_CANDIDATES:
        if n_elems % c == 0:
            return n_elems // c, c
    return leading, n_elems // leading


# ---------------------------------------------------------------------------
# Tiled mean-reduction kernel (shared by MSE and BCE)
# ---------------------------------------------------------------------------
def _make_reduce_kernel(fn, *, valid_rows, tb, tiles_per_split, grouped,
                        needs_mask):
    """Grid (split, tile). Steady-state body = pipelined DMA + VPU adds into a
    small f32 accumulator; cross-lane reduce + lane-dense store once per split."""

    def kernel(a_ref, b_ref, out_ref, acc_ref):
        t = pl.program_id(1)

        @pl.when(t == 0)
        def _():
            acc_ref[...] = jnp.zeros_like(acc_ref)

        v = fn(a_ref[...], b_ref[...])                         # (tb, cols) f32
        if needs_mask:
            base = (pl.program_id(0) * tiles_per_split + t) * tb
            row_ids = base + lax.broadcasted_iota(jnp.int32, v.shape, 0)
            v = jnp.where(row_ids < valid_rows, v, 0.0)
        if grouped:
            # Fold sublane-groups of 8 rows into an (8, cols) accumulator:
            # pure element-wise vreg adds, no XLU.
            acc_ref[...] += v.reshape(tb // 8, 8, v.shape[-1]).sum(axis=0)
        else:
            acc_ref[...] += v

        @pl.when(t == pl.num_programs(1) - 1)
        def _():
            out_ref[...] = jnp.full(out_ref.shape, jnp.sum(acc_ref[...]),
                                    jnp.float32)

    return kernel


def _tiled_mean(elementwise_fn, a, b):
    """mean(elementwise_fn(a, b)) over all elements via a row-tiled,
    double-buffered, in-kernel-masked Pallas reduction (no HBM padding)."""
    assert a.shape == b.shape, (a.shape, b.shape)
    n = math.prod(a.shape)
    splits, vmem_limit, tile_bytes = _chip_config()
    sub = _sublane_multiple(a.dtype, b.dtype)
    itemsize = max(jnp.dtype(a.dtype).itemsize, jnp.dtype(b.dtype).itemsize)

    rows, cols = _choose_layout(n, a.shape[0] if a.ndim >= 1 else 1)
    a2 = a.reshape(rows, cols)
    b2 = b.reshape(rows, cols)

    # Pathological fallback layout (huge row width not divisible by 128): even
    # an 8-row stripe would blow VMEM -> let XLA do the (HBM-bound) reduction.
    if 4 * sub * cols * itemsize + 8 * cols * 4 > vmem_limit - (4 << 20):
        return jnp.sum(elementwise_fn(a2, b2)) / jnp.float32(n)

    if rows <= sub:
        # Tiny input: single block whose row dim equals the full array dim.
        splits = 1
        tb = rows
    else:
        budget_rows = max(sub, (tile_bytes // (cols * itemsize)) // sub * sub)
        tb = min(budget_rows, _round_up(_cdiv(rows, splits), sub))
    tiles_per_split = _cdiv(_cdiv(rows, splits), tb)
    last_block = _cdiv(rows, tb) - 1
    needs_mask = splits * tiles_per_split * tb != rows
    grouped = (tb % 8 == 0) and (tb > 8)
    acc_rows = 8 if grouped else tb

    def in_map(c, t):
        # Clamp so a fully out-of-range tile (possible on the trailing
        # "parallel" split) re-reads an in-bounds block; its logical rows are
        # >= `rows`, so the in-kernel mask zeroes its contribution.
        return (jnp.minimum(c * tiles_per_split + t, last_block), 0)

    partials = pl.pallas_call(
        _make_reduce_kernel(elementwise_fn, valid_rows=rows, tb=tb,
                            tiles_per_split=tiles_per_split, grouped=grouped,
                            needs_mask=needs_mask),
        out_shape=jax.ShapeDtypeStruct((splits, 8, _LANES), jnp.float32),
        grid=(splits, tiles_per_split),
        in_specs=[pl.BlockSpec((tb, cols), in_map),
                  pl.BlockSpec((tb, cols), in_map)],
        out_specs=pl.BlockSpec((1, 8, _LANES), lambda c, t: (c, 0, 0)),
        scratch_shapes=[pltpu.VMEM((acc_rows, cols), jnp.float32)],
        compiler_params=pltpu.CompilerParams(
            dimension_semantics=("parallel", "arbitrary"),
            vmem_limit_bytes=vmem_limit,
        ),
    )(a2, b2)

    return jnp.sum(partials[:, 0, 0]) / jnp.float32(n)


# ---------------------------------------------------------------------------
# Element-wise bodies
# ---------------------------------------------------------------------------
def _sq_diff(pred, target):
    d = pred.astype(jnp.float32) - target.astype(jnp.float32)
    return d * d


def _bce_elem(p, t):
    p = p.astype(jnp.float32)
    t = t.astype(jnp.float32)
    # PyTorch's F.binary_cross_entropy clamps the log terms at -100.
    log_p = jnp.maximum(jnp.log(p), -100.0)
    log_1mp = jnp.maximum(jnp.log(1.0 - p), -100.0)
    return -(t * log_p + (1.0 - t) * log_1mp)


# ---------------------------------------------------------------------------
# Public losses
# ---------------------------------------------------------------------------
def mse_loss(pred, target):
    return _tiled_mean(_sq_diff, pred, target)


def binary_cross_entropy(adj_recon, adj_origin):
    return _tiled_mean(_bce_elem, adj_recon, adj_origin)


def _kld_kernel(mu_ref, logvar_ref, out_ref, *, inv_batch):
    mu = mu_ref[...].astype(jnp.float32)
    lv = logvar_ref[...].astype(jnp.float32)
    s = jnp.sum(1.0 + 2.0 * lv - mu * mu - jnp.exp(lv))
    out_ref[0] = -0.5 * s * jnp.float32(inv_batch)


def kl_divergence(mu, logvar):
    """-0.5 * sum(1 + 2*logvar - mu^2 - exp(logvar)) / batch (tiny -> untiled)."""
    batch = mu.shape[0]
    _, vmem_limit, _ = _chip_config()
    return pl.pallas_call(
        functools.partial(_kld_kernel, inv_batch=1.0 / batch),
        out_shape=jax.ShapeDtypeStruct((1,), jnp.float32),
        in_specs=[pl.BlockSpec(memory_space=pltpu.MemorySpace.VMEM)] * 2,
        out_specs=pl.BlockSpec(memory_space=pltpu.MemorySpace.SMEM),
        compiler_params=pltpu.CompilerParams(vmem_limit_bytes=vmem_limit),
    )(mu, logvar)[0]


def vae_rnn_loss(pred, target, mu, logvar, adj_recon, adj_origin):
    """Forward of VAE_RNNLoss: returns only the MSE loss, exactly as the
    PyTorch module does. G_loss / KLD are computed by the module but never
    used by its return value, so they are NOT evaluated here (call
    binary_cross_entropy / kl_divergence if you need them) -- this lets XLA
    skip their HBM traffic entirely."""
    del mu, logvar, adj_recon, adj_origin
    return mse_loss(pred, target)


if __name__ == "__main__":
    key = jax.random.PRNGKey(0)
    k1, k2, k3, k4, k5, k6 = jax.random.split(key, 6)

    batch, features, latent, n_nodes = 8, 128, 32, 8

    pred = jax.random.normal(k1, (batch, features), dtype=jnp.float32)
    target = jax.random.normal(k2, (batch, features), dtype=jnp.float32)
    mu = jax.random.normal(k3, (batch, latent), dtype=jnp.float32)
    logvar = 0.1 * jax.random.normal(k4, (batch, latent), dtype=jnp.float32)
    adj_recon = jax.nn.sigmoid(
        jax.random.normal(k5, (batch, n_nodes, n_nodes), dtype=jnp.float32))
    adj_origin = (jax.random.uniform(k6, (batch, n_nodes, n_nodes)) > 0.5
                  ).astype(jnp.float32)

    # Module forward (returns only the MSE loss).
    loss = vae_rnn_loss(pred, target, mu, logvar, adj_recon, adj_origin)
    # Auxiliary terms the PyTorch module computes but does not return.
    g_loss = binary_cross_entropy(adj_recon, adj_origin)
    kld = kl_divergence(mu, logvar)
    jax.block_until_ready((loss, g_loss, kld))

    # Pure-JAX references (same math as the PyTorch module).
    ref_loss = jnp.mean((pred - target) ** 2)
    p_flat = adj_recon.reshape(-1)
    t_flat = adj_origin.reshape(-1)
    ref_bce = -jnp.mean(
        t_flat * jnp.maximum(jnp.log(p_flat), -100.0)
        + (1.0 - t_flat) * jnp.maximum(jnp.log(1.0 - p_flat), -100.0))
    ref_kld = -0.5 * jnp.sum(1.0 + 2.0 * logvar - mu ** 2 - jnp.exp(logvar)) / batch

    assert jnp.allclose(loss, ref_loss, rtol=1e-5, atol=1e-5)
    assert jnp.allclose(g_loss, ref_bce, rtol=1e-5, atol=1e-5)
    assert jnp.allclose(kld, ref_kld, rtol=1e-5, atol=1e-5)

    print("KERNEL_OK")
</pallas_src>

<mosaic_0001>
module attributes {stable_mosaic.version = 11 : i64} {
  func.func @kernel(%arg0: i32, %arg1: i32, %arg2: memref<8x128xf32, #tpu.memory_space<vmem>>, %arg3: memref<8x128xf32, #tpu.memory_space<vmem>>, %arg4: memref<1x8x128xf32, #tpu.memory_space<vmem>>, %arg5: memref<8x128xf32, #tpu.memory_space<vmem>>) attributes {dimension_semantics = [#tpu.dimension_semantics<parallel>, #tpu.dimension_semantics<arbitrary>], iteration_bounds = array<i64: 1, 1>, scalar_prefetch = 0 : i64, scratch_operands = 1 : i64, tpu.core_type = #tpu.core_type<tc>, window_params = [{transform_indices = @transform_0, window_bounds = array<i64: 8, 128>}, {transform_indices = @transform_1, window_bounds = array<i64: 8, 128>}, {transform_indices = @transform_2, window_bounds = array<i64: 1, 8, 128>}]} {
    %c0_i32 = arith.constant 0 : i32
    %0 = arith.cmpi eq, %arg1, %c0_i32 : i32
    %1 = arith.extui %0 : i1 to i32
    %c0_i32_0 = arith.constant 0 : i32
    %2 = arith.cmpi ne, %1, %c0_i32_0 : i32
    scf.if %2 {
      %cst = arith.constant 0.000000e+00 : f32
      %13 = vector.broadcast %cst : f32 to vector<8x128xf32>
      %c0_10 = arith.constant 0 : index
      %c0_11 = arith.constant 0 : index
      %14 = vector.load %arg5[%c0_10, %c0_11] : memref<8x128xf32, #tpu.memory_space<vmem>>, vector<8x128xf32>
      tpu.vector_store %arg5[%c0_10, %c0_11], %13 {strides = array<i32>} : memref<8x128xf32, #tpu.memory_space<vmem>>, vector<8x128xf32>,
    } else {
    }
    %c0 = arith.constant 0 : index
    %c0_1 = arith.constant 0 : index
    %3 = vector.load %arg2[%c0, %c0_1] : memref<8x128xf32, #tpu.memory_space<vmem>>, vector<8x128xf32>
    %c0_2 = arith.constant 0 : index
    %c0_3 = arith.constant 0 : index
    %4 = vector.load %arg3[%c0_2, %c0_3] : memref<8x128xf32, #tpu.memory_space<vmem>>, vector<8x128xf32>
    %5 = arith.subf %3, %4 : vector<8x128xf32>
    %6 = arith.mulf %5, %5 : vector<8x128xf32>
    %c0_4 = arith.constant 0 : index
    %c0_5 = arith.constant 0 : index
    %7 = vector.load %arg5[%c0_4, %c0_5] : memref<8x128xf32, #tpu.memory_space<vmem>>, vector<8x128xf32>
    %8 = arith.addf %7, %6 : vector<8x128xf32>
    %c0_6 = arith.constant 0 : index
    %c0_7 = arith.constant 0 : index
    %9 = vector.load %arg5[%c0_6, %c0_7] : memref<8x128xf32, #tpu.memory_space<vmem>>, vector<8x128xf32>
    tpu.vector_store %arg5[%c0_6, %c0_7], %8 {strides = array<i32>} : memref<8x128xf32, #tpu.memory_space<vmem>>, vector<8x128xf32>,
    %c0_i32_8 = arith.constant 0 : i32
    %10 = arith.cmpi eq, %arg1, %c0_i32_8 : i32
    %11 = arith.extui %10 : i1 to i32
    %c0_i32_9 = arith.constant 0 : i32
    %12 = arith.cmpi ne, %11, %c0_i32_9 : i32
    scf.if %12 {
      %c0_10 = arith.constant 0 : index
      %c0_11 = arith.constant 0 : index
      %13 = vector.load %arg5[%c0_10, %c0_11] : memref<8x128xf32, #tpu.memory_space<vmem>>, vector<8x128xf32>
      %14 = vector.shape_cast %13 : vector<8x128xf32> to vector<1x8x128xf32>
      %cst = arith.constant dense<0.000000e+00> : vector<1xf32>
      %15 = vector.multi_reduction <add>, %14, %cst [1, 2] : vector<1x8x128xf32> to vector<1xf32>
      %16 = vector.shape_cast %15 : vector<1xf32> to vector<1x1x1xf32>
      %17 = vector.extract %16[0, 0, 0] : f32 from vector<1x1x1xf32>
      %18 = vector.broadcast %17 : f32 to vector<1x8x128xf32>
      %c0_12 = arith.constant 0 : index
      %c0_13 = arith.constant 0 : index
      %c0_14 = arith.constant 0 : index
      %19 = vector.load %arg4[%c0_12, %c0_13, %c0_14] : memref<1x8x128xf32, #tpu.memory_space<vmem>>, vector<1x8x128xf32>
      tpu.vector_store %arg4[%c0_12, %c0_13, %c0_14], %18 {strides = array<i32>} : memref<1x8x128xf32, #tpu.memory_space<vmem>>, vector<1x8x128xf32>,
    } else {
    }
    return
  }
  func.func @transform_0(%arg0: i32, %arg1: i32) -> (i32, i32) {
    %c1_i32 = arith.constant 1 : i32
    %0 = arith.muli %arg0, %c1_i32 : i32
    %1 = arith.addi %0, %arg1 : i32
    %c0_i32 = arith.constant 0 : i32
    %2 = arith.minsi %1, %c0_i32 : i32
    %c0_i32_0 = arith.constant 0 : i32
    %c0_i32_1 = arith.constant 0 : i32
    return %2, %c0_i32_0 : i32, i32
  }
  func.func @transform_1(%arg0: i32, %arg1: i32) -> (i32, i32) {
    %c1_i32 = arith.constant 1 : i32
    %0 = arith.muli %arg0, %c1_i32 : i32
    %1 = arith.addi %0, %arg1 : i32
    %c0_i32 = arith.constant 0 : i32
    %2 = arith.minsi %1, %c0_i32 : i32
    %c0_i32_0 = arith.constant 0 : i32
    %c0_i32_1 = arith.constant 0 : i32
    return %2, %c0_i32_0 : i32, i32
  }
  func.func @transform_2(%arg0: i32, %arg1: i32) -> (i32, i32, i32) {
    %c0_i32 = arith.constant 0 : i32
    %c0_i32_0 = arith.constant 0 : i32
    %c0_i32_1 = arith.constant 0 : i32
    return %arg0, %c0_i32, %c0_i32_0 : i32, i32, i32
  }
}

</mosaic_0001>

<llo_original>
// kernel: tpu_custom_call.1
$region0: #{tpu_custom_call.1}
  #allocation0 [shape = 'u32[]', space=smem, size = 0x4, offset = 0x4, fixed_abs, tag = 'smem constant byte address 0x4 - core index']
  #allocation1 [shape = 'u32[144,128]{1,0:T(1,128)}', space=vmem, size = 0x12000, scoped, tag = 'internal scratch']
  #allocation2 [shape = 'f32[8,128]{1,0:T(8,128)}', space=vmem, size = 0x1000, scoped, tag = 'scratch operand']
  %s0 = inlined_call_operand.hbm [shape: f32[8,128], index: 0, kind: input, shape index: {}]
  %s1 = inlined_call_operand.hbm [shape: f32[8,128], index: 1, kind: input, shape index: {}]
  %s2 = inlined_call_operand.hbm [shape: f32[1,8,128], index: 2, kind: output, shape index: {}]
  %s3 = sld [smem:[#allocation0]]
  $region34: #{tpu_custom_call.1} parent=0
    _
  %s5 = ssub.s32 1, %s3
  %s6 = scalar_select 0, %s5, %s3
  $region1: #{tpu_custom_call.1} parent=0
    #allocation3 [shape = 'u8[4096]{0}', space=vmem, size = 0x1000, scoped, tag = 'input window, operand 0, single buffered']
    #allocation4 [shape = 's32[1]{0}', space=sflag, size = 0x4, scoped, tag = 'scoped memory for tpu_custom_call.1']
    #allocation5 [shape = 's32[1]{0}', space=sflag, size = 0x4, scoped, tag = 'scoped memory for tpu_custom_call.1']
    #allocation6 [shape = 'u8[4096]{0}', space=vmem, size = 0x1000, scoped, tag = 'input window, operand 1, single buffered']
    #allocation7 [shape = 's32[1]{0}', space=sflag, size = 0x4, scoped, tag = 'scoped memory for tpu_custom_call.1']
    #allocation8 [shape = 'u8[4096]{0}', space=vmem, size = 0x1000, scoped, tag = 'output window, operand 0, single buffered']
    %7 = vsyncpa [#allocation4], 0
    %8 = vsyncpa [#allocation7], 0
    %9 = vsyncpa [#allocation5], 0
    // Predicated region
    $region2: #{tpu_custom_call.1} parent=1 // pred_check
      _
    $region3: #{tpu_custom_call.1} parent=1 // pred_check_branch
      %11 = sbr.rel (0) target = $region5
    $region4: #{tpu_custom_call.1} parent=1 // pred_region
      %s12 = sadd.s32 0, 0
      %p13 = scmp.lt.s32.totalorder %s12, 0
      %s14 = scalar_select %p13, %s12, 0
      %s16 = ssub.s32 128, 128
      %17 = vsyncadd [#allocation4], %s16
      %s18 = smul.addr %s14, 128
      %s19 = scalar_lea.hbm %s0, %s18
      %s21 = sshll.u32 [#allocation3], 4
      %s22 = int_to_ptr.vmem [resolvable:$true] %s21
      %24 = dma.hbm_to_vmem [thread:$0]  %s19, 128, %s22, [#allocation4]
    $region5: #{tpu_custom_call.1} parent=1 // pred_fallthru
      _
    // Predicated region
    $region6: #{tpu_custom_call.1} parent=1 // pred_check
      _
    $region7: #{tpu_custom_call.1} parent=1 // pred_check_branch
      %26 = sbr.rel (0) target = $region9
    $region8: #{tpu_custom_call.1} parent=1 // pred_region
      %s27 = sadd.s32 0, 0
      %p28 = scmp.lt.s32.totalorder %s27, 0
      %s29 = scalar_select %p28, %s27, 0
      %s31 = ssub.s32 128, 128
      %32 = vsyncadd [#allocation7], %s31
      %s33 = smul.addr %s29, 128
      %s34 = scalar_lea.hbm %s1, %s33
      %s36 = sshll.u32 [#allocation6], 4
      %s37 = int_to_ptr.vmem [resolvable:$true] %s36
      %39 = dma.hbm_to_vmem [thread:$0]  %s34, 128, %s37, [#allocation7]
    $region9: #{tpu_custom_call.1} parent=1 // pred_fallthru
      _
    // Predicated region
    $region10: #{tpu_custom_call.1} parent=1 // pred_check
      _
    $region11: #{tpu_custom_call.1} parent=1 // pred_check_branch
      %41 = sbr.rel (0) target = $region13
    $region12: #{tpu_custom_call.1} parent=1 // pred_region
      %42 = dma.done [#allocation4], 128
    $region13: #{tpu_custom_call.1} parent=1 // pred_fallthru
      _
    // Predicated region
    $region14: #{tpu_custom_call.1} parent=1 // pred_check
      _
    $region15: #{tpu_custom_call.1} parent=1 // pred_check_branch
      %44 = sbr.rel (0) target = $region17
    $region16: #{tpu_custom_call.1} parent=1 // pred_region
      %45 = dma.done [#allocation7], 128
    $region17: #{tpu_custom_call.1} parent=1 // pred_fallthru
      _
    %s46 = sadd.s32 0, 0
    %p47 = scmp.lt.s32.totalorder %s46, 0
    %s48 = scalar_select %p47, %s46, 0
    %s49 = sadd.s32 0, 0
    %p50 = scmp.lt.s32.totalorder %s49, 0
    %s51 = scalar_select %p50, %s49, 0
    %p52 = scmp.eq.s32.totalorder 0, 0
    // Predicated region
    $region18: #{tpu_custom_call.1} parent=1 // pred_check
      %p53 = pneg %p52
    $region19: #{tpu_custom_call.1} parent=1 // pred_check_branch
      %55 = sbr.rel (%p53) target = $region21
    $region20: #{tpu_custom_call.1} parent=1 // pred_region
      %56 = vst [vmem:[#allocation2] sm:$0xff] 0.0
    $region21: #{tpu_custom_call.1} parent=1 // pred_fallthru
      _
    %v57 = vld [vmem:[#allocation3] sm:$0xff]
    %v58 = vld [vmem:[#allocation6] sm:$0xff]
    %v59 = vsub.f32 %v57, %v58
    %v60 = vmul.f32 %v59, %v59
    %v61 = vld [vmem:[#allocation2] sm:$0xff]
    %v62 = vadd.f32 %v61, %v60
    %63 = vst [vmem:[#allocation2] sm:$0xff] %v62
    // Predicated region
    $region22: #{tpu_custom_call.1} parent=1 // pred_check
      %p64 = pneg %p52
    $region23: #{tpu_custom_call.1} parent=1 // pred_check_branch
      %66 = sbr.rel (%p64) target = $region25
    $region24: #{tpu_custom_call.1} parent=1 // pred_region
      %v67 = vld [vmem:[#allocation2] sm:$0xff]
      %68 = vadd.xlane.f32.xlu0 %v67
      %v69 = vpop.xlane.xlu0 %68
      %v70 = vrot.slane %v69, 4
      %v71 = vadd.f32 %v69, %v70
      %v72 = vrot.slane %v71, 2
      %v73 = vadd.f32 %v71, %v72
      %v74 = vrot.slane %v73, 1
      %v75 = vadd.f32 %v73, %v74
      %s76 = vtos %v75
      %v77 = vstv %s76
      %78 = vst [vmem:[#allocation8] sm:$0xff] %v77
    $region25: #{tpu_custom_call.1} parent=1 // pred_fallthru
      _
    // Predicated region
    $region26: #{tpu_custom_call.1} parent=1 // pred_check
      _
    $region27: #{tpu_custom_call.1} parent=1 // pred_check_branch
      %80 = sbr.rel (0) target = $region29
    $region28: #{tpu_custom_call.1} parent=1 // pred_region
      %s82 = ssub.s32 128, 128
      %83 = vsyncadd [#allocation5], %s82
      %s85 = sshll.u32 [#allocation8], 4
      %s86 = int_to_ptr.vmem [resolvable:$true] %s85
      %88 = dma.vmem_to_hbm [thread:$0]  %s86, 128, %s2, [#allocation5]
    $region29: #{tpu_custom_call.1} parent=1 // pred_fallthru
      _
    // Predicated region
    $region30: #{tpu_custom_call.1} parent=1 // pred_check
      _
    $region31: #{tpu_custom_call.1} parent=1 // pred_check_branch
      %90 = sbr.rel (0) target = $region33
    $region32: #{tpu_custom_call.1} parent=1 // pred_region
      %91 = dma.done [#allocation5], 128
    $region33: #{tpu_custom_call.1} parent=1 // pred_fallthru
      _
    %92 = vsyncpa [#allocation4], 1
    %93 = vsyncpa [#allocation7], 1
    %94 = vsyncpa [#allocation5], 1

</llo_original>
